<compile_context>
chip_gen: v7x
topology: tpu7x:2x2x1
jax: 0.10.0
libtpu: 0.0.40
codegen_flags: <defaults>
</compile_context>

<pallas_src>
import functools

import jax
import jax.numpy as jnp
from jax.experimental import pallas as pl
from jax.experimental.pallas import tpu as pltpu


def _l_color_kernel(x_ref, o_ref, acc_ref, *, inv_hw):
    k = pl.program_id(1)

    @pl.when(k == 0)
    def _():
        acc_ref[...] = jnp.zeros_like(acc_ref)

    # (TB, 3, TN) block -> per-channel partial sums (TB, 3), accumulated in f32.
    x = x_ref[...].astype(jnp.float32)
    acc_ref[...] += jnp.sum(x, axis=-1)

    @pl.when(k == pl.num_programs(1) - 1)
    def _():
        m = acc_ref[...] * inv_hw               # per-channel means (TB, 3)
        mr = m[:, 0:1]
        mg = m[:, 1:2]
        mb = m[:, 2:3]
        drg = (mr - mg) ** 2
        drb = (mr - mb) ** 2
        dgb = (mb - mg) ** 2
        kk = jnp.sqrt(drg * drg + drb * drb + dgb * dgb)   # (TB, 1)
        o_ref[...] = kk.astype(o_ref.dtype)


def l_color(x, *, block_bytes=2 * 1024 * 1024):
    b, c, h, w = x.shape
    assert c == 3, "L_color expects exactly 3 channels (RGB)"
    n = h * w
    itemsize = x.dtype.itemsize

    # Batch elements per grid step (amortizes per-step overhead, denser stores).
    tb = min(b, 8)
    b_pad = ((b + tb - 1) // tb) * tb

    # Spatial tile: multiple of 128 lanes, sized so one block is ~block_bytes.
    tn = max(128, (block_bytes // (tb * c * itemsize)) // 128 * 128)
    n128 = ((n + 127) // 128) * 128
    tn = min(tn, n128)
    n_pad = ((n + tn - 1) // tn) * tn

    # Lane-dense layout: flatten spatial dims; zero-pad (zeros don't affect sums).
    xf = x.reshape(b, c, n)
    if b_pad != b or n_pad != n:
        xf = jnp.pad(xf, ((0, b_pad - b), (0, 0), (0, n_pad - n)))

    grid = (b_pad // tb, n_pad // tn)

    out = pl.pallas_call(
        functools.partial(_l_color_kernel, inv_hw=1.0 / float(n)),
        out_shape=jax.ShapeDtypeStruct((b_pad, 1), x.dtype),
        grid_spec=pltpu.PrefetchScalarGridSpec(
            num_scalar_prefetch=0,
            grid=grid,
            in_specs=[pl.BlockSpec((tb, c, tn), lambda i, k: (i, 0, k))],
            out_specs=pl.BlockSpec((tb, 1), lambda i, k: (i, 0)),
            scratch_shapes=[pltpu.VMEM((tb, c), jnp.float32)],
        ),
        compiler_params=pltpu.CompilerParams(
            dimension_semantics=("parallel", "arbitrary")),
    )(xf)

    return out[:b].reshape(b, 1, 1, 1)


def l_color_ref(x):
    # Pure-JAX reference mirroring the PyTorch forward.
    mean_rgb = jnp.mean(x, axis=(2, 3), keepdims=True)
    mr = mean_rgb[:, 0:1]
    mg = mean_rgb[:, 1:2]
    mb = mean_rgb[:, 2:3]
    drg = (mr - mg) ** 2
    drb = (mr - mb) ** 2
    dgb = (mb - mg) ** 2
    return jnp.sqrt(drg ** 2 + drb ** 2 + dgb ** 2)


if __name__ == "__main__":
    key = jax.random.PRNGKey(0)

    # Primary check: the spec's small shape.
    x = jax.random.uniform(key, (2, 3, 16, 16), dtype=jnp.float32)
    out = jax.block_until_ready(l_color(x))
    ref = l_color_ref(x)
    assert out.shape == (2, 1, 1, 1), out.shape
    assert jnp.allclose(out, ref, atol=1e-6, rtol=1e-6), (out, ref)

    # Exercise the spatial-reduction accumulator (many spatial grid steps).
    k1, k2 = jax.random.split(key)
    x2 = jax.random.uniform(k1, (4, 3, 64, 96), dtype=jnp.float32)
    out2 = jax.block_until_ready(l_color(x2, block_bytes=4096))
    assert jnp.allclose(out2, l_color_ref(x2), atol=1e-6, rtol=1e-5), out2

    # Exercise lane padding (H*W not a multiple of 128).
    x3 = jax.random.uniform(k2, (2, 3, 10, 14), dtype=jnp.float32)
    out3 = jax.block_until_ready(l_color(x3))
    assert jnp.allclose(out3, l_color_ref(x3), atol=1e-6, rtol=1e-5), out3

    print("KERNEL_OK")
</pallas_src>

<mosaic_0001>
module attributes {stable_mosaic.version = 11 : i64} {
  func.func @_l_color_kernel(%arg0: i32, %arg1: i32, %arg2: memref<2x3x256xf32, #tpu.memory_space<vmem>>, %arg3: memref<2x1xf32, #tpu.memory_space<vmem>>, %arg4: memref<2x3xf32, #tpu.memory_space<vmem>>) attributes {dimension_semantics = [#tpu.dimension_semantics<parallel>, #tpu.dimension_semantics<arbitrary>], iteration_bounds = array<i64: 1, 1>, scalar_prefetch = 0 : i64, scratch_operands = 1 : i64, tpu.core_type = #tpu.core_type<tc>, window_params = [{transform_indices = @transform_0, window_bounds = array<i64: 2, 3, 256>}, {transform_indices = @transform_1, window_bounds = array<i64: 2, 1>}]} {
    %c0_i32 = arith.constant 0 : i32
    %0 = arith.cmpi eq, %arg1, %c0_i32 : i32
    %1 = arith.extui %0 : i1 to i32
    %c0_i32_0 = arith.constant 0 : i32
    %2 = arith.cmpi ne, %1, %c0_i32_0 : i32
    scf.if %2 {
      %cst_9 = arith.constant 0.000000e+00 : f32
      %11 = vector.broadcast %cst_9 : f32 to vector<2x3xf32>
      %c0_10 = arith.constant 0 : index
      %c0_11 = arith.constant 0 : index
      %12 = vector.load %arg4[%c0_10, %c0_11] : memref<2x3xf32, #tpu.memory_space<vmem>>, vector<2x3xf32>
      tpu.vector_store %arg4[%c0_10, %c0_11], %11 {strides = array<i32>} : memref<2x3xf32, #tpu.memory_space<vmem>>, vector<2x3xf32>,
    } else {
    }
    %c0 = arith.constant 0 : index
    %c0_1 = arith.constant 0 : index
    %c0_2 = arith.constant 0 : index
    %3 = vector.load %arg2[%c0, %c0_1, %c0_2] : memref<2x3x256xf32, #tpu.memory_space<vmem>>, vector<2x3x256xf32>
    %c0_3 = arith.constant 0 : index
    %c0_4 = arith.constant 0 : index
    %4 = vector.load %arg4[%c0_3, %c0_4] : memref<2x3xf32, #tpu.memory_space<vmem>>, vector<2x3xf32>
    %cst = arith.constant dense<0.000000e+00> : vector<2x3xf32>
    %5 = vector.multi_reduction <add>, %3, %cst [2] : vector<2x3x256xf32> to vector<2x3xf32>
    %6 = arith.addf %4, %5 : vector<2x3xf32>
    %c0_5 = arith.constant 0 : index
    %c0_6 = arith.constant 0 : index
    %7 = vector.load %arg4[%c0_5, %c0_6] : memref<2x3xf32, #tpu.memory_space<vmem>>, vector<2x3xf32>
    tpu.vector_store %arg4[%c0_5, %c0_6], %6 {strides = array<i32>} : memref<2x3xf32, #tpu.memory_space<vmem>>, vector<2x3xf32>,
    %c0_i32_7 = arith.constant 0 : i32
    %8 = arith.cmpi eq, %arg1, %c0_i32_7 : i32
    %9 = arith.extui %8 : i1 to i32
    %c0_i32_8 = arith.constant 0 : i32
    %10 = arith.cmpi ne, %9, %c0_i32_8 : i32
    scf.if %10 {
      %c0_9 = arith.constant 0 : index
      %c0_10 = arith.constant 0 : index
      %11 = vector.load %arg4[%c0_9, %c0_10] : memref<2x3xf32, #tpu.memory_space<vmem>>, vector<2x3xf32>
      %cst_11 = arith.constant 3.906250e-03 : f32
      %12 = vector.broadcast %cst_11 : f32 to vector<2x3xf32>
      %13 = arith.mulf %11, %12 : vector<2x3xf32>
      %14 = vector.extract_strided_slice %13 {offsets = [0, 0], sizes = [2, 1], strides = [1, 1]} : vector<2x3xf32> to vector<2x1xf32>
      %15 = vector.extract_strided_slice %13 {offsets = [0, 1], sizes = [2, 1], strides = [1, 1]} : vector<2x3xf32> to vector<2x1xf32>
      %16 = vector.extract_strided_slice %13 {offsets = [0, 2], sizes = [2, 1], strides = [1, 1]} : vector<2x3xf32> to vector<2x1xf32>
      %17 = arith.subf %14, %15 : vector<2x1xf32>
      %18 = arith.mulf %17, %17 : vector<2x1xf32>
      %19 = arith.subf %14, %16 : vector<2x1xf32>
      %20 = arith.mulf %19, %19 : vector<2x1xf32>
      %21 = arith.subf %16, %15 : vector<2x1xf32>
      %22 = arith.mulf %21, %21 : vector<2x1xf32>
      %23 = arith.mulf %18, %18 : vector<2x1xf32>
      %24 = arith.mulf %20, %20 : vector<2x1xf32>
      %25 = arith.addf %23, %24 : vector<2x1xf32>
      %26 = arith.mulf %22, %22 : vector<2x1xf32>
      %27 = arith.addf %25, %26 : vector<2x1xf32>
      %28 = math.sqrt %27 : vector<2x1xf32>
      %c0_12 = arith.constant 0 : index
      %c0_13 = arith.constant 0 : index
      %29 = vector.load %arg3[%c0_12, %c0_13] : memref<2x1xf32, #tpu.memory_space<vmem>>, vector<2x1xf32>
      tpu.vector_store %arg3[%c0_12, %c0_13], %28 {strides = array<i32>} : memref<2x1xf32, #tpu.memory_space<vmem>>, vector<2x1xf32>,
    } else {
    }
    return
  }
  func.func @transform_0(%arg0: i32, %arg1: i32) -> (i32, i32, i32) {
    %c0_i32 = arith.constant 0 : i32
    %c0_i32_0 = arith.constant 0 : i32
    return %arg0, %c0_i32, %arg1 : i32, i32, i32
  }
  func.func @transform_1(%arg0: i32, %arg1: i32) -> (i32, i32) {
    %c0_i32 = arith.constant 0 : i32
    %c0_i32_0 = arith.constant 0 : i32
    return %arg0, %c0_i32 : i32, i32
  }
}

</mosaic_0001>

<llo_original>
// kernel: tpu_custom_call.1
$region0: #{tpu_custom_call.1}
  #allocation0 [shape = 'u32[]', space=smem, size = 0x4, offset = 0x4, fixed_abs, tag = 'smem constant byte address 0x4 - core index']
  #allocation1 [shape = 'u32[144,128]{1,0:T(1,128)}', space=vmem, size = 0x12000, scoped, tag = 'internal scratch']
  #allocation2 [shape = 'f32[2,3]{1,0:T(2,128)}', space=vmem, size = 0x400, scoped, tag = 'scratch operand']
  %s0 = inlined_call_operand.vmem [shape: f32[2,3,256], index: 0, kind: input, shape index: {}]
  %s1 = inlined_call_operand.vmem [shape: f32[2,1], index: 1, kind: output, shape index: {}]
  %s2 = sld [smem:[#allocation0]]
  $region22: #{tpu_custom_call.1} parent=0
    _
  %s4 = ssub.s32 1, %s2
  %s5 = scalar_select 0, %s4, %s2
  // Predicated region
  $region2: #{tpu_custom_call.1} parent=0 // pred_check
    _
  $region3: #{tpu_custom_call.1} parent=0 // pred_check_branch
    %7 = sbr.rel (0) target = $region5
  $region4: #{tpu_custom_call.1} parent=0 // pred_region
    _
  $region5: #{tpu_custom_call.1} parent=0 // pred_fallthru
    _
  %p8 = scmp.eq.s32.totalorder 0, 0
  // Predicated region
  $region6: #{tpu_custom_call.1} parent=0 // pred_check
    %p9 = pneg %p8
  $region7: #{tpu_custom_call.1} parent=0 // pred_check_branch
    %11 = sbr.rel (%p9) target = $region9
  $region8: #{tpu_custom_call.1} parent=0 // pred_region
    %vm12 = vcmask 17408
    %13 = vst.msk [vmem:[#allocation2] sm:$0x3] %vm12, 0.0
  $region9: #{tpu_custom_call.1} parent=0 // pred_fallthru
    _
  %v14 = vld [vmem:[%s0] sm:$0x77]
  %v15 = vld [vmem:[%s0 + $0x8] sm:$0x77]
  %v16 = vld [vmem:[#allocation2] sm:$0x3]
  %v19 = vcombine.high %v14, %v14
  %v20 = vcombine.high %v15, %v15
  %vm23 = vcmask 1042432
  %v24 = vsel %vm23, %v14, 0.0
  %v25 = vsel %vm23, %v19, 0.0
  %v26 = vadd.f32 %v24, %v25
  %27 = vadd.xlane.f32.xlu0 %v26
  %v28 = vpop.xlane.xlu0 %27
  %v29 = vsel %vm23, %v15, 0.0
  %v30 = vsel %vm23, %v20, 0.0
  %v31 = vadd.f32 %v29, %v30
  %32 = vadd.xlane.f32.xlu0 %v31
  %v33 = vpop.xlane.xlu0 %32
  %v36 = vlaneseq
  %v37 = vand.u32 %v36, 127
  %v38 = vlaneseq
  %v39 = vshrl.u32 %v38, 7
  %v40 = vsub.s32 %v37, %v39
  %v41 = vrot.slane %v28, %v40
  %v42 = vlaneseq
  %v43 = vshrl.u32 %v42, 7
  %v44 = vsub.s32 %v37, %v43
  %v45 = vrot.slane %v33, %v44
  %vm46 = vcmask 1041409
  %v47 = vsel %vm46, %v45, %v41
  %v49 = vadd.f32 %v16, %v47
  %vm50 = vcmask 17408
  %51 = vst.msk [vmem:[#allocation2] sm:$0x3] %vm50, %v49
  // Predicated region
  $region10: #{tpu_custom_call.1} parent=0 // pred_check
    %p52 = pneg %p8
  $region11: #{tpu_custom_call.1} parent=0 // pred_check_branch
    %54 = sbr.rel (%p52) target = $region13
  $region12: #{tpu_custom_call.1} parent=0 // pred_region
    %v55 = vld [vmem:[#allocation2] sm:$0x3]
    %v56 = vmul.f32 %v55, 0.00390625
    %58 = vrot.lane.b32.xlu0 %v56, 127
    %v59 = vpop.permute.xlu0 %58
    %v61 = vsub.f32 %v56, %v59
    %v62 = vmul.f32 %v61, %v61
    %63 = vrot.lane.b32.xlu0 %v56, 126
    %v64 = vpop.permute.xlu0 %63
    %v66 = vsub.f32 %v56, %v64
    %v67 = vmul.f32 %v66, %v66
    %68 = vrot.lane.b32.xlu0 %v56, 1
    %v69 = vpop.permute.xlu0 %68
    %v71 = vsub.f32 %v56, %v69
    %v72 = vmul.f32 %v71, %v71
    %v73 = vmul.f32 %v62, %v62
    %v74 = vmul.f32 %v67, %v67
    %v75 = vadd.f32 %v73, %v74
    %v76 = vmul.f32 %v72, %v72
    %78 = vrot.lane.b32.xlu0 %v76, 126
    %v79 = vpop.permute.xlu0 %78
    %v81 = vadd.f32 %v75, %v79
    %v82 = vrsqrt.pop %v81
    %v83 = vmul.f32 %v81, %v82
    %vm84 = vcmp.eq.f32.partialorder %v81, inf
    %v85 = vsel %vm84, %v81, %v83
    %vm86 = vcmp.eq.f32.partialorder %v81, 0.0
    %v87 = vand.u32 %v81, 2147483648
    %v88 = vsel %vm86, %v87, %v85
    %vm89 = vcmask 1024
    %90 = vst.msk [vmem:[%s1] sm:$0x3] %vm89, %v88
  $region13: #{tpu_custom_call.1} parent=0 // pred_fallthru
    _
  // Predicated region
  $region14: #{tpu_custom_call.1} parent=0 // pred_check
    _
  $region15: #{tpu_custom_call.1} parent=0 // pred_check_branch
    %92 = sbr.rel (0) target = $region17
  $region16: #{tpu_custom_call.1} parent=0 // pred_region
    _
  $region17: #{tpu_custom_call.1} parent=0 // pred_fallthru
    _
  // Predicated region
  $region18: #{tpu_custom_call.1} parent=0 // pred_check
    _
  $region19: #{tpu_custom_call.1} parent=0 // pred_check_branch
    %94 = sbr.rel (0) target = $region21
  $region20: #{tpu_custom_call.1} parent=0 // pred_region
    _
  $region21: #{tpu_custom_call.1} parent=0 // pred_fallthru
    _

</llo_original>
